<compile_context>
chip_gen: v7x
topology: tpu7x:2x2x1
jax: 0.10.0
libtpu: 0.0.40
codegen_flags: <defaults>
</compile_context>

<pallas_src>
import jax
import jax.numpy as jnp
from jax.experimental import pallas as pl
from jax.experimental.pallas import tpu as pltpu


def critic2_kernel(xa_ref, p_ref, out_ref):
    hid = p_ref.shape[1] // 2                           # 128
    xa = xa_ref[...]                                    # (B, 4) f32

    # ---- layer 1 (both heads fused), pure VPU: 4 broadcast FMAs + bias ----
    h = p_ref[4:5, :]                                   # b1, (1, 2H)
    h = h + xa[:, 0:1] * p_ref[0:1, :]                  # obs dim 0
    h = h + xa[:, 1:2] * p_ref[1:2, :]                  # obs dim 1
    h = h + xa[:, 2:3] * p_ref[2:3, :]                  # obs dim 2
    h = h + xa[:, 3:4] * p_ref[3:4, :]                  # action
    h = jnp.maximum(h, 0.0)                             # ReLU, (B, 2H)

    # ---- layer 2: per-head lane reduction (XLU) + bias, min on the VPU ----
    q1 = jnp.sum(h[:, :hid] * p_ref[5:6, :hid], axis=-1, keepdims=True)
    q2 = jnp.sum(h[:, hid:] * p_ref[6:7, :hid], axis=-1, keepdims=True)
    q1 = q1 + p_ref[7:8, 0:1]                           # b2_q1
    q2 = q2 + p_ref[7:8, 1:2]                           # b2_q2

    out_ref[...] = jnp.minimum(q1, q2)                  # (B, 1)


def pack_params(params):
    """Pack twin-head params into one tile-aligned (8, 2*HID) f32 slab.

    Call ONCE when parameters change (not per forward pass); the result is
    passed straight to the kernel as a single dense DMA.
    """
    (w1a, b1a, w2a, b2a, w1b, b1b, w2b, b2b) = params
    hid = w1a.shape[1]                                   # 128

    w1 = jnp.concatenate([w1a, w1b], axis=1)             # (4, 2H)
    b1 = jnp.concatenate([b1a, b1b], axis=1)             # (1, 2H)
    w2t1 = jnp.pad(w2a.T, ((0, 0), (0, hid)))            # (1, 2H) head-1 in lanes 0:H
    w2t2 = jnp.pad(w2b.T, ((0, 0), (0, hid)))            # (1, 2H) head-2 in lanes 0:H
    b2 = jnp.pad(jnp.concatenate([b2a, b2b], axis=1),
                 ((0, 0), (0, 2 * hid - 2)))             # (1, 2H)

    slab = jnp.concatenate([w1, b1, w2t1, w2t2, b2], axis=0)   # (8, 2H)
    return slab.astype(jnp.float32)


@jax.jit
def critic2_forward(x, a, param_slab):
    """x: (B, 3), a: (B, 1), param_slab: (8, 256) -> q: (B, 1)."""
    B = x.shape[0]
    xa = jnp.concatenate([x.astype(jnp.float32), a.astype(jnp.float32)],
                         axis=-1)                        # (B, 4); fuses under jit
    return pl.pallas_call(
        critic2_kernel,
        out_shape=jax.ShapeDtypeStruct((B, 1), jnp.float32),
        in_specs=[pl.BlockSpec(memory_space=pltpu.MemorySpace.VMEM),
                  pl.BlockSpec(memory_space=pltpu.MemorySpace.VMEM)],
        out_specs=pl.BlockSpec(memory_space=pltpu.MemorySpace.VMEM),
    )(xa, param_slab)


def init_linear(key, fan_in, fan_out):
    """PyTorch nn.Linear default init: U(-1/sqrt(fan_in), 1/sqrt(fan_in))."""
    kw, kb = jax.random.split(key)
    bound = 1.0 / jnp.sqrt(float(fan_in))
    w = jax.random.uniform(kw, (fan_in, fan_out), jnp.float32, -bound, bound)
    b = jax.random.uniform(kb, (1, fan_out), jnp.float32, -bound, bound)
    return w, b


def reference_forward(x, a, params):
    """Plain-JAX reference using the ORIGINAL (unfused) parameters."""
    (w1a, b1a, w2a, b2a, w1b, b1b, w2b, b2b) = params
    xa = jnp.concatenate([x, a], axis=-1)
    q1 = jnp.maximum(xa @ w1a + b1a, 0.0) @ w2a + b2a
    q2 = jnp.maximum(xa @ w1b + b1b, 0.0) @ w2b + b2b
    return jnp.minimum(q1, q2)


if __name__ == "__main__":
    key = jax.random.PRNGKey(0)
    k_x, k_a, k1, k2, k3, k4 = jax.random.split(key, 6)

    B, OBS, ACT, HID = 8, 3, 1, 128
    x = jax.random.normal(k_x, (B, OBS), jnp.float32)
    a = jax.random.normal(k_a, (B, ACT), jnp.float32)

    w1a, b1a = init_linear(k1, OBS + ACT, HID)
    w2a, b2a = init_linear(k2, HID, 1)
    w1b, b1b = init_linear(k3, OBS + ACT, HID)
    w2b, b2b = init_linear(k4, HID, 1)
    params = (w1a, b1a, w2a, b2a, w1b, b1b, w2b, b2b)

    # Pack once (parameters only change on optimizer steps), reuse every call.
    param_slab = jax.block_until_ready(pack_params(params))

    q = jax.block_until_ready(critic2_forward(x, a, param_slab))
    q_ref = reference_forward(x, a, params)

    assert q.shape == (B, 1)
    # f32 end-to-end; tolerance allows for summation-order differences between
    # the VPU-FMA / lane-reduction formulation and the reference matmuls.
    assert jnp.allclose(q, q_ref, atol=1e-4, rtol=1e-4)
    print("KERNEL_OK")
</pallas_src>

<mosaic_0001>
module attributes {stable_mosaic.version = 11 : i64} {
  func.func @critic2_kernel(%arg0: memref<8x4xf32, #tpu.memory_space<vmem>>, %arg1: memref<8x256xf32, #tpu.memory_space<vmem>>, %arg2: memref<8x1xf32, #tpu.memory_space<vmem>>) attributes {dimension_semantics = [], scalar_prefetch = 0 : i64, scratch_operands = 0 : i64, tpu.core_type = #tpu.core_type<tc>} {
    %c0 = arith.constant 0 : index
    %c0_0 = arith.constant 0 : index
    %0 = vector.load %arg0[%c0, %c0_0] : memref<8x4xf32, #tpu.memory_space<vmem>>, vector<8x4xf32>
    %c4 = arith.constant 4 : index
    %c0_1 = arith.constant 0 : index
    %1 = vector.load %arg1[%c4, %c0_1] : memref<8x256xf32, #tpu.memory_space<vmem>>, vector<1x256xf32>
    %2 = vector.extract_strided_slice %0 {offsets = [0, 0], sizes = [8, 1], strides = [1, 1]} : vector<8x4xf32> to vector<8x1xf32>
    %c0_2 = arith.constant 0 : index
    %c0_3 = arith.constant 0 : index
    %3 = vector.load %arg1[%c0_2, %c0_3] : memref<8x256xf32, #tpu.memory_space<vmem>>, vector<1x256xf32>
    %4 = vector.broadcast %2 : vector<8x1xf32> to vector<8x256xf32>
    %5 = vector.broadcast %3 : vector<1x256xf32> to vector<8x256xf32>
    %6 = arith.mulf %4, %5 : vector<8x256xf32>
    %7 = vector.broadcast %1 : vector<1x256xf32> to vector<8x256xf32>
    %8 = arith.addf %7, %6 : vector<8x256xf32>
    %9 = vector.extract_strided_slice %0 {offsets = [0, 1], sizes = [8, 1], strides = [1, 1]} : vector<8x4xf32> to vector<8x1xf32>
    %c1 = arith.constant 1 : index
    %c0_4 = arith.constant 0 : index
    %10 = vector.load %arg1[%c1, %c0_4] : memref<8x256xf32, #tpu.memory_space<vmem>>, vector<1x256xf32>
    %11 = vector.broadcast %9 : vector<8x1xf32> to vector<8x256xf32>
    %12 = vector.broadcast %10 : vector<1x256xf32> to vector<8x256xf32>
    %13 = arith.mulf %11, %12 : vector<8x256xf32>
    %14 = arith.addf %8, %13 : vector<8x256xf32>
    %15 = vector.extract_strided_slice %0 {offsets = [0, 2], sizes = [8, 1], strides = [1, 1]} : vector<8x4xf32> to vector<8x1xf32>
    %c2 = arith.constant 2 : index
    %c0_5 = arith.constant 0 : index
    %16 = vector.load %arg1[%c2, %c0_5] : memref<8x256xf32, #tpu.memory_space<vmem>>, vector<1x256xf32>
    %17 = vector.broadcast %15 : vector<8x1xf32> to vector<8x256xf32>
    %18 = vector.broadcast %16 : vector<1x256xf32> to vector<8x256xf32>
    %19 = arith.mulf %17, %18 : vector<8x256xf32>
    %20 = arith.addf %14, %19 : vector<8x256xf32>
    %21 = vector.extract_strided_slice %0 {offsets = [0, 3], sizes = [8, 1], strides = [1, 1]} : vector<8x4xf32> to vector<8x1xf32>
    %c3 = arith.constant 3 : index
    %c0_6 = arith.constant 0 : index
    %22 = vector.load %arg1[%c3, %c0_6] : memref<8x256xf32, #tpu.memory_space<vmem>>, vector<1x256xf32>
    %23 = vector.broadcast %21 : vector<8x1xf32> to vector<8x256xf32>
    %24 = vector.broadcast %22 : vector<1x256xf32> to vector<8x256xf32>
    %25 = arith.mulf %23, %24 : vector<8x256xf32>
    %26 = arith.addf %20, %25 : vector<8x256xf32>
    %cst = arith.constant 0.000000e+00 : f32
    %27 = vector.broadcast %cst : f32 to vector<8x256xf32>
    %28 = arith.maximumf %26, %27 : vector<8x256xf32>
    %29 = vector.extract_strided_slice %28 {offsets = [0, 0], sizes = [8, 128], strides = [1, 1]} : vector<8x256xf32> to vector<8x128xf32>
    %c5 = arith.constant 5 : index
    %c0_7 = arith.constant 0 : index
    %30 = vector.load %arg1[%c5, %c0_7] : memref<8x256xf32, #tpu.memory_space<vmem>>, vector<1x128xf32>
    %31 = vector.broadcast %30 : vector<1x128xf32> to vector<8x128xf32>
    %32 = arith.mulf %29, %31 : vector<8x128xf32>
    %cst_8 = arith.constant dense<0.000000e+00> : vector<8xf32>
    %33 = vector.multi_reduction <add>, %32, %cst_8 [1] : vector<8x128xf32> to vector<8xf32>
    %34 = vector.shape_cast %33 : vector<8xf32> to vector<8x1xf32>
    %35 = vector.extract_strided_slice %28 {offsets = [0, 128], sizes = [8, 128], strides = [1, 1]} : vector<8x256xf32> to vector<8x128xf32>
    %c6 = arith.constant 6 : index
    %c0_9 = arith.constant 0 : index
    %36 = vector.load %arg1[%c6, %c0_9] : memref<8x256xf32, #tpu.memory_space<vmem>>, vector<1x128xf32>
    %37 = vector.broadcast %36 : vector<1x128xf32> to vector<8x128xf32>
    %38 = arith.mulf %35, %37 : vector<8x128xf32>
    %cst_10 = arith.constant dense<0.000000e+00> : vector<8xf32>
    %39 = vector.multi_reduction <add>, %38, %cst_10 [1] : vector<8x128xf32> to vector<8xf32>
    %40 = vector.shape_cast %39 : vector<8xf32> to vector<8x1xf32>
    %c7 = arith.constant 7 : index
    %c0_11 = arith.constant 0 : index
    %41 = vector.load %arg1[%c7, %c0_11] : memref<8x256xf32, #tpu.memory_space<vmem>>, vector<1x1xf32>
    %42 = vector.broadcast %41 : vector<1x1xf32> to vector<8x1xf32>
    %43 = arith.addf %34, %42 : vector<8x1xf32>
    %c7_12 = arith.constant 7 : index
    %c1_13 = arith.constant 1 : index
    %44 = vector.load %arg1[%c7_12, %c1_13] : memref<8x256xf32, #tpu.memory_space<vmem>>, vector<1x1xf32>
    %45 = vector.broadcast %44 : vector<1x1xf32> to vector<8x1xf32>
    %46 = arith.addf %40, %45 : vector<8x1xf32>
    %47 = arith.minimumf %43, %46 : vector<8x1xf32>
    %c0_14 = arith.constant 0 : index
    %c0_15 = arith.constant 0 : index
    %48 = vector.load %arg2[%c0_14, %c0_15] : memref<8x1xf32, #tpu.memory_space<vmem>>, vector<8x1xf32>
    tpu.vector_store %arg2[%c0_14, %c0_15], %47 {strides = array<i32>} : memref<8x1xf32, #tpu.memory_space<vmem>>, vector<8x1xf32>,
    return
  }
}

</mosaic_0001>

<llo_original>
// kernel: critic2_forward.1
$region0: #{critic2_forward.1}
  #allocation0 [shape = 'u32[]', space=smem, size = 0x4, offset = 0x4, fixed_abs, tag = 'smem constant byte address 0x4 - core index']
  #allocation1 [shape = 'u32[144,128]{1,0:T(1,128)}', space=vmem, size = 0x12000, scoped, tag = 'internal scratch']
  %s0 = inlined_call_operand.vmem [shape: f32[8,4], index: 0, kind: input, shape index: {}]
  %s1 = inlined_call_operand.vmem [shape: f32[8,256], index: 1, kind: input, shape index: {}]
  %s2 = inlined_call_operand.vmem [shape: f32[8,1], index: 2, kind: output, shape index: {}]
  %s3 = sld [smem:[#allocation0]]
  $region18: #{critic2_forward.1} parent=0
    _
  %s5 = ssub.s32 1, %s3
  %s6 = scalar_select 0, %s5, %s3
  // Predicated region
  $region2: #{critic2_forward.1} parent=0 // pred_check
    _
  $region3: #{critic2_forward.1} parent=0 // pred_check_branch
    %8 = sbr.rel (0) target = $region5
  $region4: #{critic2_forward.1} parent=0 // pred_region
    _
  $region5: #{critic2_forward.1} parent=0 // pred_fallthru
    _
  // Predicated region
  $region6: #{critic2_forward.1} parent=0 // pred_check
    _
  $region7: #{critic2_forward.1} parent=0 // pred_check_branch
    %10 = sbr.rel (0) target = $region9
  $region8: #{critic2_forward.1} parent=0 // pred_region
    _
  $region9: #{critic2_forward.1} parent=0 // pred_fallthru
    _
  %v11 = vld [vmem:[%s0] sm:$0xff]
  %s12 = scalar_lea.vmem %s1, 4
  %v13 = vld [vmem:[%s12] ss:$8 sm:$0x3]
  %v14 = vld [vmem:[%s1] ss:$8 sm:$0x3]
  %16 = vset.pattern.permute.xlu0 0
  %17 = vperm.xlu0 %16, %v11
  %v18 = vpop.permute.xlu0 %17
  %v21 = vlaneseq
  %v22 = vshrl.u32 %v21, 7
  %v23 = vsub.s32 0, %v22
  %v24 = vrot.slane %v14, %v23
  %v25 = vlaneseq
  %v26 = vshrl.u32 %v25, 7
  %v27 = vsub.s32 1, %v26
  %v28 = vrot.slane %v14, %v27
  %v31 = vmul.f32 %v18, %v24
  %v32 = vmul.f32 %v18, %v28
  %v34 = vlaneseq
  %v35 = vshrl.u32 %v34, 7
  %v36 = vsub.s32 0, %v35
  %v37 = vrot.slane %v13, %v36
  %v38 = vlaneseq
  %v39 = vshrl.u32 %v38, 7
  %v40 = vsub.s32 1, %v39
  %v41 = vrot.slane %v13, %v40
  %v44 = vadd.f32 %v37, %v31
  %v45 = vadd.f32 %v41, %v32
  %s46 = scalar_lea.vmem %s1, 1
  %v47 = vld [vmem:[%s46] ss:$8 sm:$0x3]
  %48 = vset.pattern.permute.xlu0 1
  %49 = vperm.xlu0 %48, %v11
  %v50 = vpop.permute.xlu0 %49
  %v53 = vlaneseq
  %v54 = vshrl.u32 %v53, 7
  %v55 = vsub.s32 0, %v54
  %v56 = vrot.slane %v47, %v55
  %v57 = vlaneseq
  %v58 = vshrl.u32 %v57, 7
  %v59 = vsub.s32 1, %v58
  %v60 = vrot.slane %v47, %v59
  %v63 = vmul.f32 %v50, %v56
  %v64 = vmul.f32 %v50, %v60
  %v65 = vadd.f32 %v44, %v63
  %v66 = vadd.f32 %v45, %v64
  %s67 = scalar_lea.vmem %s1, 2
  %v68 = vld [vmem:[%s67] ss:$8 sm:$0x3]
  %69 = vset.pattern.permute.xlu0 2
  %70 = vperm.xlu0 %69, %v11
  %v71 = vpop.permute.xlu0 %70
  %v74 = vlaneseq
  %v75 = vshrl.u32 %v74, 7
  %v76 = vsub.s32 0, %v75
  %v77 = vrot.slane %v68, %v76
  %v78 = vlaneseq
  %v79 = vshrl.u32 %v78, 7
  %v80 = vsub.s32 1, %v79
  %v81 = vrot.slane %v68, %v80
  %v84 = vmul.f32 %v71, %v77
  %v85 = vmul.f32 %v71, %v81
  %v86 = vadd.f32 %v65, %v84
  %v87 = vadd.f32 %v66, %v85
  %s88 = scalar_lea.vmem %s1, 3
  %v89 = vld [vmem:[%s88] ss:$8 sm:$0x3]
  %90 = vset.pattern.permute.xlu0 3
  %91 = vperm.xlu0 %90, %v11
  %v92 = vpop.permute.xlu0 %91
  %v95 = vlaneseq
  %v96 = vshrl.u32 %v95, 7
  %v97 = vsub.s32 0, %v96
  %v98 = vrot.slane %v89, %v97
  %v99 = vlaneseq
  %v100 = vshrl.u32 %v99, 7
  %v101 = vsub.s32 1, %v100
  %v102 = vrot.slane %v89, %v101
  %v105 = vmul.f32 %v92, %v98
  %v106 = vmul.f32 %v92, %v102
  %v107 = vadd.f32 %v86, %v105
  %v108 = vadd.f32 %v87, %v106
  %v109 = vmax.f32 %v107, 0.0
  %v110 = vmax.f32 %v108, 0.0
  %v111 = vld [vmem:[%s1 + $0x5] ss:$0 sm:$0xff]
  %v112 = vmul.f32 %v109, %v111
  %113 = vadd.xlane.f32.xlu0 %v112
  %v114 = vpop.xlane.xlu0 %113
  %v115 = vld [vmem:[%s1 + $0x6] ss:$0 sm:$0xff]
  %v116 = vmul.f32 %v110, %v115
  %117 = vadd.xlane.f32.xlu0 %v116
  %v118 = vpop.xlane.xlu0 %117
  %v119 = vld [vmem:[%s1 + $0x7] ss:$0 sm:$0xff]
  %v120 = vadd.f32 %v114, %v119
  %v121 = vadd.f32 %v118, %v119
  %123 = vrot.lane.b32.xlu0 %v121, 127
  %v124 = vpop.permute.xlu0 %123
  %v126 = vmin.f32 %v120, %v124
  %vm127 = vcmask 7168
  %128 = vst.msk [vmem:[%s2] sm:$0xff] %vm127, %v126
  // Predicated region
  $region10: #{critic2_forward.1} parent=0 // pred_check
    _
  $region11: #{critic2_forward.1} parent=0 // pred_check_branch
    %130 = sbr.rel (0) target = $region13
  $region12: #{critic2_forward.1} parent=0 // pred_region
    _
  $region13: #{critic2_forward.1} parent=0 // pred_fallthru
    _
  // Predicated region
  $region14: #{critic2_forward.1} parent=0 // pred_check
    _
  $region15: #{critic2_forward.1} parent=0 // pred_check_branch
    %132 = sbr.rel (0) target = $region17
  $region16: #{critic2_forward.1} parent=0 // pred_region
    _
  $region17: #{critic2_forward.1} parent=0 // pred_fallthru
    _

</llo_original>
